<compile_context>
chip_gen: v6e
topology: v6e:2x2x1
jax: 0.10.0
libtpu: 0.0.40
codegen_flags: <defaults>
</compile_context>

<pallas_src>
import functools

import numpy as np
import jax
import jax.numpy as jnp
from jax.experimental import pallas as pl
from jax.experimental.pallas import tpu as pltpu


# ---------------------------------------------------------------------------
# Kernel
# ---------------------------------------------------------------------------
def _cbam_kernel(x_ref, w1_ref, w2_ref, m_ref, bconv_ref, o_ref, *, bt):
    # x_ref block: (Bt, C, HW) f32, lane-dense in HW.
    x = x_ref[...]                                         # (Bt, C, HW)

    # ---- channel attention: both pooled vectors batched through one MLP ----
    avg = jnp.mean(x, axis=2)                              # (Bt, C)
    mx = jnp.max(x, axis=2)                                # (Bt, C)
    ones = jnp.ones((2 * bt, 1), jnp.float32)
    # [avg; max] rows, plus a ones column so the bias rides inside the matmul.
    v = jnp.concatenate([jnp.concatenate([avg, mx], axis=0), ones], axis=1)   # (2Bt, C+1)
    h = jnp.dot(v, w1_ref[...], preferred_element_type=jnp.float32)           # (2Bt, mid)
    h = jnp.where(h > 0, h, 0.1 * h)                       # LeakyReLU(0.1)
    h = jnp.concatenate([h, ones], axis=1)                 # (2Bt, mid+1)
    o = jnp.dot(h, w2_ref[...], preferred_element_type=jnp.float32)           # (2Bt, C)
    ca = jax.nn.sigmoid(o[:bt, :] + o[bt:, :])             # (Bt, C)

    x1 = x * ca[:, :, None]                                # channel-scaled (Bt, C, HW)

    # ---- spatial attention: 7x7 conv folded into ONE MXU matmul ----
    savg = jnp.mean(x1, axis=1)                            # (Bt, HW)
    smax = jnp.max(x1, axis=1)                             # (Bt, HW)
    pooled = jnp.concatenate([savg, smax], axis=1)         # (Bt, 2*HW)
    conv = jnp.dot(pooled, m_ref[...],
                   preferred_element_type=jnp.float32)     # (Bt, HW)
    sa = jax.nn.sigmoid(conv + bconv_ref[0])               # (Bt, HW)

    # ---- fused, lane-dense output store ----
    o_ref[...] = x1 * sa[:, None, :]


# ---------------------------------------------------------------------------
# Host-side: 7x7 conv (2 -> 1 channels, padding=3) as a (2*HW, HW) matrix
# ---------------------------------------------------------------------------
def _build_conv_operator(wconv, H, W):
    """Return M (2*HW, HW) s.t. conv2d(cat([avg,max]), wconv, pad=3).flat
    == concat([avg_flat, max_flat], -1) @ M (zero-padding edge effects baked in)."""
    HW = H * W
    K, P = 7, 3
    oh = np.repeat(np.arange(H), W)                        # (HW,)
    ow = np.tile(np.arange(W), H)                          # (HW,)
    kh = np.repeat(np.arange(K), K)                        # (49,)
    kw = np.tile(np.arange(K), K)                          # (49,)
    ih = oh[:, None] + kh[None, :] - P                     # (HW, 49) input row
    iw = ow[:, None] + kw[None, :] - P                     # (HW, 49) input col
    valid = (ih >= 0) & (ih < H) & (iw >= 0) & (iw < W)
    q = np.clip(ih, 0, H - 1) * W + np.clip(iw, 0, W - 1)  # (HW, 49) input flat idx
    p = np.broadcast_to(np.arange(HW)[:, None], q.shape)   # (HW, 49) output flat idx

    w_flat = jnp.asarray(wconv, jnp.float32).reshape(2, K * K)          # (2, 49)
    vals = jnp.where(jnp.asarray(valid)[None], w_flat[:, None, :], 0.0)  # (2, HW, 49)
    M = jnp.zeros((2, HW, HW), jnp.float32).at[:, q, p].add(vals)
    return M.reshape(2 * HW, HW)


# ---------------------------------------------------------------------------
# Wrapper
# ---------------------------------------------------------------------------
def cbam_forward(x, params):
    """x: (B, C, H, W) f32. params = (w1, b1, w2, b2, wconv, bconv), PyTorch layouts."""
    w1, b1, w2, b2, wconv, bconv = params
    B, C, H, W = x.shape
    HW = H * W
    mid = w1.shape[0]

    # Fold MLP biases into the weight matrices (ones-column trick).
    w1_aug = jnp.concatenate(
        [jnp.asarray(w1, jnp.float32).T, jnp.asarray(b1, jnp.float32).reshape(1, mid)],
        axis=0)                                                          # (C+1, mid)
    w2_aug = jnp.concatenate(
        [jnp.asarray(w2, jnp.float32).T, jnp.asarray(b2, jnp.float32).reshape(1, C)],
        axis=0)                                                          # (mid+1, C)

    # Spatial conv as a precomputed MXU operator; conv bias as one SMEM scalar.
    m_op = _build_conv_operator(wconv, H, W)                             # (2*HW, HW)
    bconv_arr = jnp.asarray(bconv, jnp.float32).reshape(1)

    x_flat = x.reshape(B, C, HW).astype(jnp.float32)

    # --- batch tiling: ~1 MiB x-block per grid step, >=2 steps when B>=2 ---
    per_batch_bytes = C * HW * 4
    target_block_bytes = 1 << 20
    bt = max(1, min(B, target_block_bytes // max(per_batch_bytes, 1)))
    if B >= 2:
        bt = min(bt, pl.cdiv(B, 2))       # keep both v7x TensorCores busy
    n_tiles = pl.cdiv(B, bt)
    b_pad = n_tiles * bt
    if b_pad != B:
        x_flat = jnp.pad(x_flat, ((0, b_pad - B), (0, 0), (0, 0)))

    # VMEM budget: in+out double buffers + (double-buffered) constants + slack.
    # TODO(synk): very large C*H*W (single block > ~8 MiB) would need a tiled
    # two-pass reduction variant instead of one (Bt, C, HW) block per step.
    block_bytes = bt * per_batch_bytes
    const_bytes = (2 * HW * HW + (C + 1) * mid + (mid + 1) * C) * 4
    vmem_limit = int(min(max(4 * block_bytes + 2 * const_bytes + (8 << 20),
                             32 << 20), 64 << 20))

    kernel = functools.partial(_cbam_kernel, bt=bt)
    out_flat = pl.pallas_call(
        kernel,
        out_shape=jax.ShapeDtypeStruct((b_pad, C, HW), jnp.float32),
        grid=(n_tiles,),
        in_specs=[
            pl.BlockSpec((bt, C, HW), lambda b: (b, 0, 0)),              # x
            pl.BlockSpec((C + 1, mid), lambda b: (0, 0)),                # w1 (+b1)
            pl.BlockSpec((mid + 1, C), lambda b: (0, 0)),                # w2 (+b2)
            pl.BlockSpec((2 * HW, HW), lambda b: (0, 0)),                # conv operator
            pl.BlockSpec(memory_space=pltpu.MemorySpace.SMEM),           # conv bias
        ],
        out_specs=pl.BlockSpec((bt, C, HW), lambda b: (b, 0, 0)),
        compiler_params=pltpu.CompilerParams(
            dimension_semantics=("parallel",),
            vmem_limit_bytes=vmem_limit),
    )(x_flat, w1_aug, w2_aug, m_op, bconv_arr)

    return out_flat[:B].reshape(B, C, H, W)


# ---------------------------------------------------------------------------
# Pure-JAX reference (for correctness check)
# ---------------------------------------------------------------------------
def cbam_ref(x, params):
    w1, b1, w2, b2, wconv, bconv = params
    avg = x.mean(axis=(2, 3))                              # (B, C)
    mx = x.max(axis=(2, 3))                                # (B, C)

    def mlp(v):
        h = v @ w1.T + b1
        h = jnp.where(h > 0, h, 0.1 * h)                   # LeakyReLU(0.1) as in module
        return h @ w2.T + b2

    ca = jax.nn.sigmoid(mlp(avg) + mlp(mx))[:, :, None, None]
    x1 = ca * x

    avg_s = x1.mean(axis=1, keepdims=True)
    mx_s = x1.max(axis=1, keepdims=True)
    stacked = jnp.concatenate([avg_s, mx_s], axis=1)       # (B, 2, H, W)
    conv = jax.lax.conv_general_dilated(
        stacked, wconv, window_strides=(1, 1), padding=((3, 3), (3, 3)),
        dimension_numbers=("NCHW", "OIHW", "NCHW"))
    sa = jax.nn.sigmoid(conv + bconv.reshape(1, 1, 1, 1))
    return sa * x1


if __name__ == "__main__":
    B, C, H, W = 2, 32, 16, 16          # c1 = 32, reduction = 16 -> mid = 2
    mid = C // 16

    key = jax.random.PRNGKey(0)
    k_x, k_w1, k_b1, k_w2, k_b2, k_wc, k_bc = jax.random.split(key, 7)

    x = jax.random.normal(k_x, (B, C, H, W), jnp.float32)

    # Deterministic synthetic parameters (PyTorch Linear weight layout: (out, in))
    w1 = 0.2 * jax.random.normal(k_w1, (mid, C), jnp.float32)
    b1 = 0.1 * jax.random.normal(k_b1, (mid,), jnp.float32)
    w2 = 0.2 * jax.random.normal(k_w2, (C, mid), jnp.float32)
    b2 = 0.1 * jax.random.normal(k_b2, (C,), jnp.float32)
    # Conv2d(2 -> 1, k=7) weight layout OIHW
    wconv = 0.2 * jax.random.normal(k_wc, (1, 2, 7, 7), jnp.float32)
    bconv = 0.1 * jax.random.normal(k_bc, (1,), jnp.float32)

    params = (w1, b1, w2, b2, wconv, bconv)

    out = jax.block_until_ready(cbam_forward(x, params))
    ref = cbam_ref(x, params)

    assert out.shape == (B, C, H, W)
    assert bool(jnp.allclose(out, ref, atol=1e-3, rtol=1e-3)), "mismatch vs reference"

    print("KERNEL_OK")
</pallas_src>

<mosaic_0001>
module attributes {stable_mosaic.version = 11 : i64} {
  func.func @_cbam_kernel(%arg0: i32, %arg1: memref<1x32x256xf32, #tpu.memory_space<vmem>>, %arg2: memref<33x2xf32, #tpu.memory_space<vmem>>, %arg3: memref<3x32xf32, #tpu.memory_space<vmem>>, %arg4: memref<512x256xf32, #tpu.memory_space<vmem>>, %arg5: memref<1xf32, #tpu.memory_space<smem>>, %arg6: memref<1x32x256xf32, #tpu.memory_space<vmem>>) attributes {dimension_semantics = [#tpu.dimension_semantics<parallel>], iteration_bounds = array<i64: 2>, scalar_prefetch = 0 : i64, scratch_operands = 0 : i64, tpu.core_type = #tpu.core_type<tc>, window_params = [{transform_indices = @transform_0, window_bounds = array<i64: 1, 32, 256>}, {pipeline_mode = #tpu.pipeline_mode<synchronous>, transform_indices = @transform_1, window_bounds = array<i64: 33, 2>}, {pipeline_mode = #tpu.pipeline_mode<synchronous>, transform_indices = @transform_2, window_bounds = array<i64: 3, 32>}, {pipeline_mode = #tpu.pipeline_mode<synchronous>, transform_indices = @transform_3, window_bounds = array<i64: 512, 256>}, {transform_indices = @transform_4, window_bounds = array<i64: 1>}, {transform_indices = @transform_5, window_bounds = array<i64: 1, 32, 256>}]} {
    %c0 = arith.constant 0 : index
    %c0_0 = arith.constant 0 : index
    %c0_1 = arith.constant 0 : index
    %0 = vector.load %arg1[%c0, %c0_0, %c0_1] : memref<1x32x256xf32, #tpu.memory_space<vmem>>, vector<1x32x256xf32>
    %cst = arith.constant dense<0.000000e+00> : vector<1x32xf32>
    %1 = vector.multi_reduction <add>, %0, %cst [2] : vector<1x32x256xf32> to vector<1x32xf32>
    %cst_2 = arith.constant 2.560000e+02 : f32
    %2 = vector.broadcast %cst_2 : f32 to vector<1x32xf32>
    %3 = arith.divf %1, %2 : vector<1x32xf32>
    %cst_3 = arith.constant dense<0xFF800000> : vector<1x32xf32>
    %4 = vector.multi_reduction <maximumf>, %0, %cst_3 [2] : vector<1x32x256xf32> to vector<1x32xf32>
    %cst_4 = arith.constant 1.000000e+00 : f32
    %5 = vector.broadcast %cst_4 : f32 to vector<2x1xf32>
    %6 = tpu.concatenate %3, %4 in 0 : vector<1x32xf32>, vector<1x32xf32> -> vector<2x32xf32>
    %7 = tpu.concatenate %6, %5 in 1 : vector<2x32xf32>, vector<2x1xf32> -> vector<2x33xf32>
    %c0_5 = arith.constant 0 : index
    %c0_6 = arith.constant 0 : index
    %8 = vector.load %arg2[%c0_5, %c0_6] : memref<33x2xf32, #tpu.memory_space<vmem>>, vector<33x2xf32>
    %cst_7 = arith.constant dense<0.000000e+00> : vector<2x2xf32>
    %9 = tpu.matmul %7, %8, %cst_7 {dimension_numbers = #tpu.dot_dimension_numbers<[1], [0], [0], [1], [0, 0, 1, 1], [], []>} : vector<2x33xf32>, vector<33x2xf32>, vector<2x2xf32> -> vector<2x2xf32>
    %cst_8 = arith.constant 0.000000e+00 : f32
    %10 = vector.broadcast %cst_8 : f32 to vector<2x2xf32>
    %11 = arith.cmpf ogt, %9, %10 : vector<2x2xf32>
    %cst_9 = arith.constant 1.000000e-01 : f32
    %12 = vector.broadcast %cst_9 : f32 to vector<2x2xf32>
    %13 = arith.mulf %12, %9 : vector<2x2xf32>
    %14 = arith.select %11, %9, %13 : vector<2x2xi1>, vector<2x2xf32>
    %15 = tpu.concatenate %14, %5 in 1 : vector<2x2xf32>, vector<2x1xf32> -> vector<2x3xf32>
    %c0_10 = arith.constant 0 : index
    %c0_11 = arith.constant 0 : index
    %16 = vector.load %arg3[%c0_10, %c0_11] : memref<3x32xf32, #tpu.memory_space<vmem>>, vector<3x32xf32>
    %cst_12 = arith.constant dense<0.000000e+00> : vector<2x32xf32>
    %17 = tpu.matmul %15, %16, %cst_12 {dimension_numbers = #tpu.dot_dimension_numbers<[1], [0], [0], [1], [0, 0, 1, 1], [], []>} : vector<2x3xf32>, vector<3x32xf32>, vector<2x32xf32> -> vector<2x32xf32>
    %18 = vector.extract_strided_slice %17 {offsets = [0, 0], sizes = [1, 32], strides = [1, 1]} : vector<2x32xf32> to vector<1x32xf32>
    %19 = vector.extract_strided_slice %17 {offsets = [1, 0], sizes = [1, 32], strides = [1, 1]} : vector<2x32xf32> to vector<1x32xf32>
    %20 = arith.addf %18, %19 : vector<1x32xf32>
    %21 = arith.negf %20 : vector<1x32xf32>
    %22 = math.exp %21 : vector<1x32xf32>
    %cst_13 = arith.constant 1.000000e+00 : f32
    %23 = vector.broadcast %cst_13 : f32 to vector<1x32xf32>
    %24 = arith.addf %23, %22 : vector<1x32xf32>
    %25 = arith.divf %23, %24 : vector<1x32xf32>
    %26 = vector.shape_cast %25 : vector<1x32xf32> to vector<1x32x1xf32>
    %27 = vector.broadcast %26 : vector<1x32x1xf32> to vector<1x32x256xf32>
    %28 = arith.mulf %0, %27 : vector<1x32x256xf32>
    %cst_14 = arith.constant dense<0.000000e+00> : vector<1x256xf32>
    %29 = vector.multi_reduction <add>, %28, %cst_14 [1] : vector<1x32x256xf32> to vector<1x256xf32>
    %cst_15 = arith.constant 3.200000e+01 : f32
    %30 = vector.broadcast %cst_15 : f32 to vector<1x256xf32>
    %31 = arith.divf %29, %30 : vector<1x256xf32>
    %cst_16 = arith.constant dense<0xFF800000> : vector<1x256xf32>
    %32 = vector.multi_reduction <maximumf>, %28, %cst_16 [1] : vector<1x32x256xf32> to vector<1x256xf32>
    %33 = tpu.concatenate %31, %32 in 1 : vector<1x256xf32>, vector<1x256xf32> -> vector<1x512xf32>
    %c0_17 = arith.constant 0 : index
    %c0_18 = arith.constant 0 : index
    %34 = vector.load %arg4[%c0_17, %c0_18] : memref<512x256xf32, #tpu.memory_space<vmem>>, vector<512x256xf32>
    %cst_19 = arith.constant dense<0.000000e+00> : vector<1x256xf32>
    %35 = tpu.matmul %33, %34, %cst_19 {dimension_numbers = #tpu.dot_dimension_numbers<[1], [0], [0], [1], [0, 0, 1, 1], [], []>} : vector<1x512xf32>, vector<512x256xf32>, vector<1x256xf32> -> vector<1x256xf32>
    %c0_20 = arith.constant 0 : index
    %36 = memref.load %arg5[%c0_20] : memref<1xf32, #tpu.memory_space<smem>>
    %37 = vector.broadcast %36 : f32 to vector<1x256xf32>
    %38 = arith.addf %35, %37 : vector<1x256xf32>
    %39 = arith.negf %38 : vector<1x256xf32>
    %40 = math.exp %39 : vector<1x256xf32>
    %cst_21 = arith.constant 1.000000e+00 : f32
    %41 = vector.broadcast %cst_21 : f32 to vector<1x256xf32>
    %42 = arith.addf %41, %40 : vector<1x256xf32>
    %43 = arith.divf %41, %42 : vector<1x256xf32>
    %44 = vector.shape_cast %43 : vector<1x256xf32> to vector<1x1x256xf32>
    %45 = vector.broadcast %44 : vector<1x1x256xf32> to vector<1x32x256xf32>
    %46 = arith.mulf %28, %45 : vector<1x32x256xf32>
    %c0_22 = arith.constant 0 : index
    %c0_23 = arith.constant 0 : index
    %c0_24 = arith.constant 0 : index
    %47 = vector.load %arg6[%c0_22, %c0_23, %c0_24] : memref<1x32x256xf32, #tpu.memory_space<vmem>>, vector<1x32x256xf32>
    tpu.vector_store %arg6[%c0_22, %c0_23, %c0_24], %46 {strides = array<i32>} : memref<1x32x256xf32, #tpu.memory_space<vmem>>, vector<1x32x256xf32>,
    return
  }
  func.func @transform_0(%arg0: i32) -> (i32, i32, i32) {
    %c0_i32 = arith.constant 0 : i32
    %c0_i32_0 = arith.constant 0 : i32
    %c0_i32_1 = arith.constant 0 : i32
    return %arg0, %c0_i32, %c0_i32_0 : i32, i32, i32
  }
  func.func @transform_1(%arg0: i32) -> (i32, i32) {
    %c0_i32 = arith.constant 0 : i32
    %c0_i32_0 = arith.constant 0 : i32
    %c0_i32_1 = arith.constant 0 : i32
    return %c0_i32, %c0_i32_0 : i32, i32
  }
  func.func @transform_2(%arg0: i32) -> (i32, i32) {
    %c0_i32 = arith.constant 0 : i32
    %c0_i32_0 = arith.constant 0 : i32
    %c0_i32_1 = arith.constant 0 : i32
    return %c0_i32, %c0_i32_0 : i32, i32
  }
  func.func @transform_3(%arg0: i32) -> (i32, i32) {
    %c0_i32 = arith.constant 0 : i32
    %c0_i32_0 = arith.constant 0 : i32
    %c0_i32_1 = arith.constant 0 : i32
    return %c0_i32, %c0_i32_0 : i32, i32
  }
  func.func @transform_4(%arg0: i32) -> i32 {
    %c0_i32 = arith.constant 0 : i32
    %c0_i32_0 = arith.constant 0 : i32
    return %c0_i32 : i32
  }
  func.func @transform_5(%arg0: i32) -> (i32, i32, i32) {
    %c0_i32 = arith.constant 0 : i32
    %c0_i32_0 = arith.constant 0 : i32
    %c0_i32_1 = arith.constant 0 : i32
    return %arg0, %c0_i32, %c0_i32_0 : i32, i32, i32
  }
}

</mosaic_0001>

<llo_original>
// kernel: tpu_custom_call.1
$region0: #{tpu_custom_call.1}
  #allocation0 [shape = 'u32[]', space=smem, size = 0x4, offset = 0x4, fixed_abs, tag = 'smem constant byte address 0x4 - core index']
  #allocation1 [shape = 'u32[144,128]{1,0:T(1,128)}', space=vmem, size = 0x12000, scoped, tag = 'internal scratch']
  #allocation2 [shape = 'f32[1]{0:T(128)S(6)}', space=smem, size = 0x200, scoped, tag = 'scoped memory for tpu_custom_call.1']
  %s0 = inlined_call_operand.hbm [shape: f32[2,32,256], index: 0, kind: input, shape index: {}]
  %s1 = inlined_call_operand.vmem [shape: f32[33,2], index: 1, kind: input, shape index: {}]
  %s2 = inlined_call_operand.vmem [shape: f32[3,32], index: 2, kind: input, shape index: {}]
  %s3 = inlined_call_operand.hbm [shape: f32[512,256], index: 3, kind: input, shape index: {}]
  %s4 = inlined_call_operand.<no memory space> [shape: f32[1], index: 4, kind: input, shape index: {}]
  %s5 = inlined_call_operand.hbm [shape: f32[2,32,256], index: 5, kind: output, shape index: {}]
  %s6 = sld [smem:[#allocation0]]
  $region61: #{tpu_custom_call.1} parent=0
    _
  %s8 = ssub.s32 1, %s6
  %s9 = scalar_select 0, %s8, %s6
  %10 = sst [smem:[#allocation2]] %s4
  $region1: #{tpu_custom_call.1} parent=0
    #allocation3 [shape = 'u8[65536]{0}', space=vmem, size = 0x10000, scoped, tag = 'input window, operand 0']
    #allocation4 [shape = 's32[2]{0}', space=sflag, size = 0x8, scoped, tag = 'scoped memory for tpu_custom_call.1']
    #allocation5 [shape = 's32[2]{0}', space=sflag, size = 0x8, scoped, tag = 'scoped memory for tpu_custom_call.1']
    #allocation6 [shape = 'u8[524288]{0}', space=vmem, size = 0x80000, scoped, tag = 'input window, operand 3, single buffered']
    #allocation7 [shape = 's32[1]{0}', space=sflag, size = 0x4, scoped, tag = 'scoped memory for tpu_custom_call.1']
    #allocation8 [shape = 'u8[65536]{0}', space=vmem, size = 0x10000, scoped, tag = 'output window, operand 0']
    %11 = vsyncpa [#allocation4], 0
    %s12 = scalar_lea.sflag [#allocation4], 1
    %13 = vsyncpa %s12, 0
    %14 = vsyncpa [#allocation7], 0
    %15 = vsyncpa [#allocation5], 0
    %s16 = scalar_lea.sflag [#allocation5], 1
    %17 = vsyncpa %s16, 0
    loop: start=0, step=1, limit=4
    $region2: #{tpu_custom_call.1} parent=1 // loop_pre_header
      _
    $region3: #{tpu_custom_call.1} parent=1 // loop_header
      %s19 = sphi 0, %s23
      %p20 = scmp.ge.s32.totalorder %s19, 4
      %s29 = sphi 0, %s31
      %s32 = sphi 0, %s29
      %s33 = sphi 0, %s32
      %s49 = sphi 0, %s33
      %s53 = sphi 0, %s53
      %s55 = sphi 0, %s53
      %s56 = sphi 0, %s55
      %s70 = sphi 0, %s56
      %s74 = sphi 0, %s74
      %s76 = sphi 0, %s74
      %s77 = sphi 0, %s76
      %s91 = sphi 0, %s77
      %s95 = sphi 0, %s95
      %s97 = sphi 0, %s95
      %s98 = sphi 0, %s97
      %s112 = sphi 0, %s98
      %s116 = sphi 0, %s116
      %s118 = sphi 0, %s116
      %s119 = sphi 0, %s118
      %s133 = sphi 0, %s119
      %s139 = sphi 0, %s141
      %s142 = sphi 0, %s139
      %s143 = sphi 0, %s142
      %s159 = sphi 0, %s143
    $region4: #{tpu_custom_call.1} parent=1 // loop_header_branch
      %22 = sbr.rel (%p20) target = $region8
    $region5: #{tpu_custom_call.1} parent=1 // loop_body
      %s24 = ssub.s32 %s19, 1
      %s25 = ssub.s32 %s19, 2
      %s26 = sadd.s32 %s19, 1
      %s27 = ssub.s32 %s19, %s26
      %p28 = scmp.eq.s32.totalorder %s27, 0
      %s30 = sadd.s32 %s29, 1
      %s31 = scalar_select %p28, %s29, %s30
      %p34 = pneg %p28
      %p35 = scmp.eq.s32.totalorder %s19, 1
      %p36 = por %p34, %p35
      %p37 = scmp.ne.s32.totalorder %s29, %s32
      %p38 = scmp.eq.s32.totalorder %s19, 0
      %p39 = por %p37, %p38
      %p40 = scmp.ne.s32.totalorder %s29, %s32
      %p41 = scmp.eq.s32.totalorder %s24, 1
      %p42 = por %p40, %p41
      %p43 = scmp.ne.s32.totalorder %s32, %s33
      %p44 = scmp.eq.s32.totalorder %s24, 0
      %p45 = por %p43, %p44
      %p46 = scmp.ne.s32.totalorder %s32, %s33
      %p47 = scmp.eq.s32.totalorder %s25, 1
      %p48 = por %p46, %p47
      %p50 = scmp.ne.s32.totalorder %s33, %s49
      %p51 = scmp.eq.s32.totalorder %s25, 0
      %p52 = por %p50, %p51
      %s54 = sadd.s32 %s53, 1
      %p57 = scmp.eq.s32.totalorder %s19, 1
      %p58 = scmp.ne.s32.totalorder %s53, %s55
      %p59 = scmp.eq.s32.totalorder %s19, 0
      %p60 = por %p58, %p59
      %p61 = scmp.ne.s32.totalorder %s53, %s55
      %p62 = scmp.eq.s32.totalorder %s24, 1
      %p63 = por %p61, %p62
      %p64 = scmp.ne.s32.totalorder %s55, %s56
      %p65 = scmp.eq.s32.totalorder %s24, 0
      %p66 = por %p64, %p65
      %p67 = scmp.ne.s32.totalorder %s55, %s56
      %p68 = scmp.eq.s32.totalorder %s25, 1
      %p69 = por %p67, %p68
      %p71 = scmp.ne.s32.totalorder %s56, %s70
      %p72 = scmp.eq.s32.totalorder %s25, 0
      %p73 = por %p71, %p72
      %s75 = sadd.s32 %s74, 1
      %p78 = scmp.eq.s32.totalorder %s19, 1
      %p79 = scmp.ne.s32.totalorder %s74, %s76
      %p80 = scmp.eq.s32.totalorder %s19, 0
      %p81 = por %p79, %p80
      %p82 = scmp.ne.s32.totalorder %s74, %s76
      %p83 = scmp.eq.s32.totalorder %s24, 1
      %p84 = por %p82, %p83
      %p85 = scmp.ne.s32.totalorder %s76, %s77
      %p86 = scmp.eq.s32.totalorder %s24, 0
      %p87 = por %p85, %p86
      %p88 = scmp.ne.s32.totalorder %s76, %s77
      %p89 = scmp.eq.s32.totalorder %s25, 1
      %p90 = por %p88, %p89
      %p92 = scmp.ne.s32.totalorder %s77, %s91
      %p93 = scmp.eq.s32.totalorder %s25, 0
      %p94 = por %p92, %p93
      %s96 = sadd.s32 %s95, 1
      %p99 = scmp.eq.s32.totalorder %s19, 1
      %p100 = scmp.ne.s32.totalorder %s95, %s97
      %p101 = scmp.eq.s32.totalorder %s19, 0
      %p102 = por %p100, %p101
      %p103 = scmp.ne.s32.totalorder %s95, %s97
      %p104 = scmp.eq.s32.totalorder %s24, 1
      %p105 = por %p103, %p104
      %p106 = scmp.ne.s32.totalorder %s97, %s98
      %p107 = scmp.eq.s32.totalorder %s24, 0
      %p108 = por %p106, %p107
      %p109 = scmp.ne.s32.totalorder %s97, %s98
      %p110 = scmp.eq.s32.totalorder %s25, 1
      %p111 = por %p109, %p110
      %p113 = scmp.ne.s32.totalorder %s98, %s112
      %p114 = scmp.eq.s32.totalorder %s25, 0
      %p115 = por %p113, %p114
      %s117 = sadd.s32 %s116, 1
      %p120 = scmp.eq.s32.totalorder %s19, 1
      %p121 = scmp.ne.s32.totalorder %s116, %s118
      %p122 = scmp.eq.s32.totalorder %s19, 0
      %p123 = por %p121, %p122
      %p124 = scmp.ne.s32.totalorder %s116, %s118
      %p125 = scmp.eq.s32.totalorder %s24, 1
      %p126 = por %p124, %p125
      %p127 = scmp.ne.s32.totalorder %s118, %s119
      %p128 = scmp.eq.s32.totalorder %s24, 0
      %p129 = por %p127, %p128
      %p130 = scmp.ne.s32.totalorder %s118, %s119
      %p131 = scmp.eq.s32.totalorder %s25, 1
      %p132 = por %p130, %p131
      %p134 = scmp.ne.s32.totalorder %s119, %s133
      %p135 = scmp.eq.s32.totalorder %s25, 0
      %p136 = por %p134, %p135
      %s137 = ssub.s32 %s19, %s26
      %p138 = scmp.eq.s32.totalorder %s137, 0
      %s140 = sadd.s32 %s139, 1
      %s141 = scalar_select %p138, %s139, %s140
      %p144 = pneg %p138
      %p145 = scmp.eq.s32.totalorder %s19, 1
      %p146 = por %p144, %p145
      %p147 = scmp.ne.s32.totalorder %s139, %s142
      %p148 = scmp.eq.s32.totalorder %s19, 0
      %p149 = por %p147, %p148
      %p150 = scmp.ne.s32.totalorder %s139, %s142
      %p151 = scmp.eq.s32.totalorder %s24, 1
      %p152 = por %p150, %p151
      %p153 = scmp.ne.s32.totalorder %s142, %s143
      %p154 = scmp.eq.s32.totalorder %s24, 0
      %p155 = por %p153, %p154
      %p156 = scmp.ne.s32.totalorder %s142, %s143
      %p157 = scmp.eq.s32.totalorder %s25, 1
      %p158 = por %p156, %p157
      %p160 = scmp.ne.s32.totalorder %s143, %s159
      %p161 = scmp.eq.s32.totalorder %s25, 0
      %p162 = por %p160, %p161
      %p163 = scmp.le.s32.totalorder 1, %s19
      %p164 = scmp.lt.s32.totalorder %s19, 3
      %p165 = pnand %p163, %p164
      %p166 = pneg %p165
      // Predicated region
      $region9: #{tpu_custom_call.1} parent=5 // pred_check
        _
      $region10: #{tpu_custom_call.1} parent=5 // pred_check_branch
        %168 = sbr.rel (%p165) target = $region12
      $region11: #{tpu_custom_call.1} parent=5 // pred_region
        %s169 = ssub.s32 %s19, 1
        // Predicated region
        $region13: #{tpu_custom_call.1} parent=11 // pred_check
          %p170 = pneg %p66
        $region14: #{tpu_custom_call.1} parent=11 // pred_check_branch
          %172 = sbr.rel (%p170) target = $region16
        $region15: #{tpu_custom_call.1} parent=11 // pred_region
          _
        $region16: #{tpu_custom_call.1} parent=11 // pred_fallthru
          _
        // Predicated region
        $region17: #{tpu_custom_call.1} parent=11 // pred_check
          %p173 = pneg %p87
        $region18: #{tpu_custom_call.1} parent=11 // pred_check_branch
          %175 = sbr.rel (%p173) target = $region20
        $region19: #{tpu_custom_call.1} parent=11 // pred_region
          _
        $region20: #{tpu_custom_call.1} parent=11 // pred_fallthru
          _
        // Predicated region
        $region21: #{tpu_custom_call.1} parent=11 // pred_check
          %p176 = pneg %p108
        $region22: #{tpu_custom_call.1} parent=11 // pred_check_branch
          %178 = sbr.rel (%p176) target = $region24
        $region23: #{tpu_custom_call.1} parent=11 // pred_region
          %s180 = ssub.s32 16384, 16384
          %181 = vsyncadd [#allocation7], %s180
          %s182 = sshll.u32 [#allocation6], 4
          %s183 = int_to_ptr.vmem [resolvable:$true] %s182
          %188 = dma.hbm_to_vmem [thread:$0]  %s3, 16384, %s183, [#allocation7], 256, 256, 16
        $region24: #{tpu_custom_call.1} parent=11 // pred_fallthru
          _
        // Predicated region
        $region25: #{tpu_custom_call.1} parent=11 // pred_check
          %p189 = pneg %p129
        $region26: #{tpu_custom_call.1} parent=11 // pred_check_branch
          %191 = sbr.rel (%p189) target = $region28
        $region27: #{tpu_custom_call.1} parent=11 // pred_region
          _
        $region28: #{tpu_custom_call.1} parent=11 // pred_fallthru
          _
      $region12: #{tpu_custom_call.1} parent=5 // pred_fallthru
        _
      %p192 = scmp.lt.s32.totalorder %s19, 2
      // Predicated region
      $region29: #{tpu_custom_call.1} parent=5 // pred_check
        %p193 = pneg %p192
      $region30: #{tpu_custom_call.1} parent=5 // pred_check_branch
        %195 = sbr.rel (%p193) target = $region32
      $region31: #{tpu_custom_call.1} parent=5 // pred_region
        // Predicated region
        $region33: #{tpu_custom_call.1} parent=31 // pred_check
          %p196 = pneg %p39
        $region34: #{tpu_custom_call.1} parent=31 // pred_check_branch
          %198 = sbr.rel (%p196) target = $region36
        $region35: #{tpu_custom_call.1} parent=31 // pred_region
          %s199 = sand.u32 %s29, 1
          %s200 = scalar_lea.sflag [#allocation4], %s199
          %s201 = sand.u32 %s29, 1
          %s202 = smul.addr %s201, 64
          %s203 = scalar_lea.vmem [#allocation3], %s202
          %s205 = ssub.s32 1024, 1024
          %206 = vsyncadd %s200, %s205
          %s207 = smul.addr %s19, 8
          %s208 = smul.addr %s207, 128
          %s209 = scalar_lea.hbm %s0, %s208
          %s210 = sshll.u32 %s203, 4
          %s211 = int_to_ptr.vmem [resolvable:$true] %s210
          %216 = dma.hbm_to_vmem [thread:$0]  %s209, 1024, %s211, %s200, 256, 256, 16
        $region36: #{tpu_custom_call.1} parent=31 // pred_fallthru
          _
      $region32: #{tpu_custom_call.1} parent=5 // pred_fallthru
        _
      %p217 = scmp.le.s32.totalorder 1, %s19
      %p218 = scmp.lt.s32.totalorder %s19, 3
      %p219 = pnand %p217, %p218
      %p220 = pneg %p219
      // Predicated region
      $region37: #{tpu_custom_call.1} parent=5 // pred_check
        _
      $region38: #{tpu_custom_call.1} parent=5 // pred_check_branch
        %222 = sbr.rel (%p219) target = $region40
      $region39: #{tpu_custom_call.1} parent=5 // pred_region
        %s223 = ssub.s32 %s19, 1
        %s224 = sand.u32 %s32, 1
        %s225 = scalar_lea.sflag [#allocation4], %s224
        %s226 = sand.u32 %s32, 1
        %s227 = smul.addr %s226, 64
        %s228 = scalar_lea.vmem [#allocation3], %s227
        // Predicated region
        $region41: #{tpu_custom_call.1} parent=39 // pred_check
          %p229 = pneg %p45
        $region42: #{tpu_custom_call.1} parent=39 // pred_check_branch
          %231 = sbr.rel (%p229) target = $region44
        $region43: #{tpu_custom_call.1} parent=39 // pred_region
          %232 = dma.done %s225, 1024
        $region44: #{tpu_custom_call.1} parent=39 // pred_fallthru
          _
        // Predicated region
        $region45: #{tpu_custom_call.1} parent=39 // pred_check
          %p233 = pneg %p108
        $region46: #{tpu_custom_call.1} parent=39 // pred_check_branch
          %235 = sbr.rel (%p233) target = $region48
        $region47: #{tpu_custom_call.1} parent=39 // pred_region
          %236 = dma.done [#allocation7], 16384
        $region48: #{tpu_custom_call.1} parent=39 // pred_fallthru
          _
        %s237 = sand.u32 %s32, 1
        %s238 = scalar_lea.sflag [#allocation4], %s237
        %s239 = sand.u32 %s32, 1
        %s240 = smul.addr %s239, 64
        %s241 = scalar_lea.vmem [#allocation3], %s240
        %p242 = pneg %p45
        %p243 = pneg %p42
        %p244 = pneg %p66
        %p245 = pneg %p63
        %p246 = pneg %p87
        %p247 = pneg %p84
        %p248 = pneg %p108
        %p249 = pneg %p105
        %p250 = pneg %p129
        %p251 = pneg %p126
        %p252 = pneg %p155
        %p253 = pneg %p152
        %s254 = sand.u32 %s142, 1
        %s255 = scalar_lea.sflag [#allocation5], %s254
        %s256 = sand.u32 %s142, 1
        %s257 = smul.addr %s256, 64
        %s258 = scalar_lea.vmem [#allocation8], %s257
        %v259 = vld [vmem:[%s228] sm:$0xff]
        %v260 = vld [vmem:[%s228 + $0x8] sm:$0xff]
        %v261 = vld [vmem:[%s228 + $0x10] sm:$0xff]
        %v262 = vld [vmem:[%s228 + $0x18] sm:$0xff]
        %v263 = vld [vmem:[%s228 + $0x20] sm:$0xff]
        %v264 = vld [vmem:[%s228 + $0x28] sm:$0xff]
        %v265 = vld [vmem:[%s228 + $0x30] sm:$0xff]
        %v266 = vld [vmem:[%s228 + $0x38] sm:$0xff]
        %v267 = vadd.f32 %v259, %v260
        %268 = vadd.xlane.f32.xlu0 %v267
        %v269 = vpop.xlane.xlu0 %268
        %v270 = vadd.f32 %v261, %v262
        %271 = vadd.xlane.f32.xlu0 %v270
        %v272 = vpop.xlane.xlu0 %271
        %v273 = vadd.f32 %v263, %v264
        %274 = vadd.xlane.f32.xlu0 %v273
        %v275 = vpop.xlane.xlu0 %274
        %v276 = vadd.f32 %v265, %v266
        %277 = vadd.xlane.f32.xlu0 %v276
        %v278 = vpop.xlane.xlu0 %277
        %v279 = vrcp.pop 256.0
        %v280 = vmul.f32 %v269, %v279
        %v281 = vmul.f32 %v272, %v279
        %v282 = vmul.f32 %v275, %v279
        %v283 = vmul.f32 %v278, %v279
        %v284 = vmax.f32 %v259, %v260
        %285 = vmax.xlane.f32.xlu0 %v284
        %v286 = vpop.xlane.xlu0 %285
        %v287 = vmax.f32 %v261, %v262
        %288 = vmax.xlane.f32.xlu0 %v287
        %v289 = vpop.xlane.xlu0 %288
        %v290 = vmax.f32 %v263, %v264
        %291 = vmax.xlane.f32.xlu0 %v290
        %v292 = vpop.xlane.xlu0 %291
        %v293 = vmax.f32 %v265, %v266
        %294 = vmax.xlane.f32.xlu0 %v293
        %v295 = vpop.xlane.xlu0 %294
        %v300 = vlaneseq
        %v301 = vand.u32 %v300, 127
        %v302 = vlaneseq
        %v303 = vshrl.u32 %v302, 7
        %v304 = vsub.s32 %v301, %v303
        %v305 = vrot.slane %v280, %v304
        %v306 = vadd.s32 %v301, 4294967288
        %v307 = vlaneseq
        %v308 = vshrl.u32 %v307, 7
        %v309 = vsub.s32 %v306, %v308
        %v310 = vrot.slane %v281, %v309
        %vm311 = vcmask 130112
        %v312 = vsel %vm311, %v310, %v305
        %v313 = vadd.s32 %v301, 4294967280
        %v314 = vlaneseq
        %v315 = vshrl.u32 %v314, 7
        %v316 = vsub.s32 %v313, %v315
        %v317 = vrot.slane %v282, %v316
        %vm318 = vcmask 195712
        %v319 = vsel %vm318, %v317, %v312
        %v320 = vadd.s32 %v301, 4294967272
        %v321 = vlaneseq
        %v322 = vshrl.u32 %v321, 7
        %v323 = vsub.s32 %v320, %v322
        %v324 = vrot.slane %v283, %v323
        %vm325 = vcmask 261312
        %v326 = vsel %vm325, %v324, %v319
        %v332 = vlaneseq
        %v333 = vshrl.u32 %v332, 7
        %v334 = vsub.s32 %v301, %v333
        %v335 = vrot.slane %v286, %v334
        %v336 = vlaneseq
        %v337 = vshrl.u32 %v336, 7
        %v338 = vsub.s32 %v306, %v337
        %v339 = vrot.slane %v289, %v338
        %v340 = vsel %vm311, %v339, %v335
        %v341 = vlaneseq
        %v342 = vshrl.u32 %v341, 7
        %v343 = vsub.s32 %v313, %v342
        %v344 = vrot.slane %v292, %v343
        %v345 = vsel %vm318, %v344, %v340
        %v346 = vlaneseq
        %v347 = vshrl.u32 %v346, 7
        %v348 = vsub.s32 %v320, %v347
        %v349 = vrot.slane %v295, %v348
        %v350 = vsel %vm325, %v349, %v345
        %vm352 = vcmask 1040384
        %v353 = vsel %vm352, %v326, %v350
        %vm354 = vcmask 261120
        %v355 = vsel %vm354, %v353, 1.0
        %v356 = vld [vmem:[%s1] sm:$0xff]
        %v357 = vld [vmem:[%s1 + $0x8] sm:$0xff]
        %v358 = vld [vmem:[%s1 + $0x10] sm:$0xff]
        %v359 = vld [vmem:[%s1 + $0x18] sm:$0xff]
        %v360 = vld [vmem:[%s1 + $0x20] sm:$0x1]
        %vm361 = vcmask 269312
        %v363 = vsel %vm361, %v355, 0
        %v366 = vsel %vm352, %v360, 0
        %368 = vmatprep.subr.mxu0 0.0
        %369 = vmatpush1.msra.mxu0 0.0
        %370 = vmatprep.subr.mxu0 0.0
        %371 = vmatpush1.msra.mxu0 0.0
        %372 = vmatprep.subr.mxu0 0.0
        %373 = vmatpush1.msra.mxu0 0.0
        %374 = vmatprep.subr.mxu0 0.0
        %375 = vmatpush1.msra.mxu0 0.0
        %376 = vmatprep.subr.mxu0 0.0
        %377 = vmatpush1.msra.mxu0 0.0
        %378 = vmatprep.subr.mxu0 0.0
        %379 = vmatpush1.msra.mxu0 0.0
        %380 = vmatprep.subr.mxu0 0.0
        %381 = vmatpush1.msra.mxu0 0.0
        %382 = vmatprep.subr.mxu0 0.0
        %383 = vmatpush1.msra.mxu0 0.0
        %384 = vmatprep.subr.mxu0 0.0
        %385 = vmatpush1.msra.mxu0 0.0
        %386 = vmatprep.subr.mxu0 0.0
        %387 = vmatpush1.msra.mxu0 0.0
        %388 = vmatprep.subr.mxu0 0.0
        %389 = vmatpush1.msra.mxu0 0.0
        %390 = vmatprep.subr.mxu0 0.0
        %391 = vmatpush1.msra.mxu0 %v366
        %392 = vmatprep.subr.mxu0 0.0
        %393 = vmatpush1.msra.mxu0 %v359
        %394 = vmatprep.subr.mxu0 0.0
        %395 = vmatpush1.msra.mxu0 %v358
        %396 = vmatprep.subr.mxu0 0.0
        %397 = vmatpush1.msra.mxu0 %v357
        %398 = vmatprep.subr.mxu0 0.0
        %399 = vmatpush1.msra.mxu0 %v356
        %400 = vmatprep.subr.mxu0 0.0
        %401 = vmatpush2.msra.mxu0 0.0
        %402 = vmatprep.subr.mxu0 0.0
        %403 = vmatpush2.msra.mxu0 0.0
        %404 = vmatprep.subr.mxu0 0.0
        %405 = vmatpush2.msra.mxu0 0.0
        %406 = vmatprep.subr.mxu0 0.0
        %407 = vmatpush2.msra.mxu0 0.0
        %408 = vmatprep.subr.mxu0 0.0
        %409 = vmatpush2.msra.mxu0 0.0
        %410 = vmatprep.subr.mxu0 0.0
        %411 = vmatpush2.msra.mxu0 0.0
        %412 = vmatprep.subr.mxu0 0.0
        %413 = vmatpush2.msra.mxu0 0.0
        %414 = vmatprep.subr.mxu0 0.0
        %415 = vmatpush2.msra.mxu0 0.0
        %416 = vmatprep.subr.mxu0 0.0
        %417 = vmatpush2.msra.mxu0 0.0
        %418 = vmatprep.subr.mxu0 0.0
        %419 = vmatpush2.msra.mxu0 0.0
        %420 = vmatprep.subr.mxu0 0.0
        %421 = vmatpush2.msra.mxu0 0.0
        %422 = vmatprep.subr.mxu0 0.0
        %423 = vmatpush2.msra.mxu0 0.0
        %424 = vmatprep.subr.mxu0 0.0
        %425 = vmatpush2.msra.mxu0 0.0
        %426 = vmatprep.subr.mxu0 0.0
        %427 = vmatpush2.msra.mxu0 0.0
        %428 = vmatprep.subr.mxu0 0.0
        %429 = vmatpush2.msra.mxu0 0.0
        %430 = vmatprep.subr.mxu0 0.0
        %431 = vmatpush2.msra.mxu0 0.0
        %432 = vmatprep.mubr.f32.mxu0 0.0
        %433 = vmatmul.mubr.f32.gmra.mxu0 %v363
        %v434 = vpop.f32.mrf.mxu0
        %v435 = vadd.f32 0.0, %v434
        %v436 = vpop.f32.mrf.mxu0
        %437 = vdwg.mxu0
        %vm438 = vcmp.gt.f32.partialorder %v435, 0.0
        %v439 = vmul.f32 %v435, 0.1
        %v440 = vsel %vm438, %v435, %v439
        %vm441 = vcmask 15360
        %v442 = vsel %vm441, %v440, 1.0
        %v443 = vld [vmem:[%s2] sm:$0x7]
        %vm444 = vcmask 23552
        %v446 = vsel %vm444, %v442, 0
        %vm448 = vcmask 1042432
        %v450 = vsel %vm448, %v443, 0
        %452 = vmatprep.subr.mxu0 0.0
        %453 = vmatpush1.msra.mxu0 0.0
        %454 = vmatprep.subr.mxu0 0.0
        %455 = vmatpush1.msra.mxu0 0.0
        %456 = vmatprep.subr.mxu0 0.0
        %457 = vmatpush1.msra.mxu0 0.0
        %458 = vmatprep.subr.mxu0 0.0
        %459 = vmatpush1.msra.mxu0 0.0
        %460 = vmatprep.subr.mxu0 0.0
        %461 = vmatpush1.msra.mxu0 0.0
        %462 = vmatprep.subr.mxu0 0.0
        %463 = vmatpush1.msra.mxu0 0.0
        %464 = vmatprep.subr.mxu0 0.0
        %465 = vmatpush1.msra.mxu0 0.0
        %466 = vmatprep.subr.mxu0 0.0
        %467 = vmatpush1.msra.mxu0 0.0
        %468 = vmatprep.subr.mxu0 0.0
        %469 = vmatpush1.msra.mxu0 0.0
        %470 = vmatprep.subr.mxu0 0.0
        %471 = vmatpush1.msra.mxu0 0.0
        %472 = vmatprep.subr.mxu0 0.0
        %473 = vmatpush1.msra.mxu0 0.0
        %474 = vmatprep.subr.mxu0 0.0
        %475 = vmatpush1.msra.mxu0 0.0
        %476 = vmatprep.subr.mxu0 0.0
        %477 = vmatpush1.msra.mxu0 0.0
        %478 = vmatprep.subr.mxu0 0.0
        %479 = vmatpush1.msra.mxu0 0.0
        %480 = vmatprep.subr.mxu0 0.0
        %481 = vmatpush1.msra.mxu0 0.0
        %482 = vmatprep.subr.mxu0 0.0
        %483 = vmatpush1.msra.mxu0 %v450
        %484 = vmatprep.subr.mxu0 0.0
        %485 = vmatpush2.msra.mxu0 0.0
        %486 = vmatprep.subr.mxu0 0.0
        %487 = vmatpush2.msra.mxu0 0.0
        %488 = vmatprep.subr.mxu0 0.0
        %489 = vmatpush2.msra.mxu0 0.0
        %490 = vmatprep.subr.mxu0 0.0
        %491 = vmatpush2.msra.mxu0 0.0
        %492 = vmatprep.subr.mxu0 0.0
        %493 = vmatpush2.msra.mxu0 0.0
        %494 = vmatprep.subr.mxu0 0.0
        %495 = vmatpush2.msra.mxu0 0.0
        %496 = vmatprep.subr.mxu0 0.0
        %497 = vmatpush2.msra.mxu0 0.0
        %498 = vmatprep.subr.mxu0 0.0
        %499 = vmatpush2.msra.mxu0 0.0
        %500 = vmatprep.subr.mxu0 0.0
        %501 = vmatpush2.msra.mxu0 0.0
        %502 = vmatprep.subr.mxu0 0.0
        %503 = vmatpush2.msra.mxu0 0.0
        %504 = vmatprep.subr.mxu0 0.0
        %505 = vmatpush2.msra.mxu0 0.0
        %506 = vmatprep.subr.mxu0 0.0
        %507 = vmatpush2.msra.mxu0 0.0
        %508 = vmatprep.subr.mxu0 0.0
        %509 = vmatpush2.msra.mxu0 0.0
        %510 = vmatprep.subr.mxu0 0.0
        %511 = vmatpush2.msra.mxu0 0.0
        %512 = vmatprep.subr.mxu0 0.0
        %513 = vmatpush2.msra.mxu0 0.0
        %514 = vmatprep.subr.mxu0 0.0
        %515 = vmatpush2.msra.mxu0 0.0
        %516 = vmatprep.mubr.f32.mxu0 0.0
        %517 = vmatmul.mubr.f32.gmra.mxu0 %v446
        %v518 = vpop.f32.mrf.mxu0
        %v519 = vadd.f32 0.0, %v518
        %v520 = vpop.f32.mrf.mxu0
        %521 = vdwg.mxu0
        %v523 = vrot.slane %v519, 1
        %v525 = vadd.f32 %v519, %v523
        %v526 = vxor.u32 %v525, 2147483648
        %v527 = vmul.f32 %v526, 1.442695
        %v528 = vpow.pop %v527
        %v529 = vadd.f32 %v528, 1.0
        %v530 = vrcp.pop %v529
        %v531 = vmul.f32 1.0, %v530
        %v532 = vlaneseq
        %v533 = vshrl.u32 %v532, 7
        %v534 = vsub.s32 0, %v533
        %v535 = vrot.slane %v531, %v534
        %537 = vbcast.lane.b32.xlu0 %v535, 256
        %v538 = vpop.permute.xlu0 %537
        %s540 = sor.u32 256, 8
        %541 = vbcast.lane.b32.xlu0 %v535, %s540
        %v542 = vpop.permute.xlu0 %541
        %s544 = sor.u32 256, 16
        %545 = vbcast.lane.b32.xlu0 %v535, %s544
        %v546 = vpop.permute.xlu0 %545
        %s548 = sor.u32 256, 24
        %549 = vbcast.lane.b32.xlu0 %v535, %s548
        %v550 = vpop.permute.xlu0 %549
        %v551 = vmul.f32 %v259, %v538
        %v552 = vmul.f32 %v260, %v538
        %v553 = vmul.f32 %v261, %v542
        %v554 = vmul.f32 %v262, %v542
        %v555 = vmul.f32 %v263, %v546
        %v556 = vmul.f32 %v264, %v546
        %v557 = vmul.f32 %v265, %v550
        %v558 = vmul.f32 %v266, %v550
        %v559 = vadd.f32 %v551, %v553
        %v560 = vadd.f32 %v559, %v555
        %v561 = vadd.f32 %v560, %v557
        %v562 = vrot.slane %v561, 4
        %v563 = vadd.f32 %v561, %v562
        %v564 = vrot.slane %v563, 2
        %v565 = vadd.f32 %v563, %v564
        %v566 = vrot.slane %v565, 1
        %v567 = vadd.f32 %v565, %v566
        %v568 = vadd.f32 %v552, %v554
        %v569 = vadd.f32 %v568, %v556
        %v570 = vadd.f32 %v569, %v558
        %v571 = vrot.slane %v570, 4
        %v572 = vadd.f32 %v570, %v571
        %v573 = vrot.slane %v572, 2
        %v574 = vadd.f32 %v572, %v573
        %v575 = vrot.slane %v574, 1
        %v576 = vadd.f32 %v574, %v575
        %v577 = vrcp.pop 32.0
        %v578 = vmul.f32 %v567, %v577
        %v579 = vmul.f32 %v576, %v577
        %v580 = vmax.f32 %v551, %v555
        %v581 = vmax.f32 %v553, %v557
        %v582 = vmax.f32 %v580, %v581
        %v583 = vrot.slane %v582, 4
        %v584 = vmax.f32 %v582, %v583
        %v585 = vrot.slane %v584, 2
        %v586 = vmax.f32 %v584, %v585
        %v587 = vrot.slane %v586, 1
        %v588 = vmax.f32 %v586, %v587
        %v589 = vmax.f32 %v552, %v556
        %v590 = vmax.f32 %v554, %v558
        %v591 = vmax.f32 %v589, %v590
        %v592 = vrot.slane %v591, 4
        %v593 = vmax.f32 %v591, %v592
        %v594 = vrot.slane %v593, 2
        %v595 = vmax.f32 %v593, %v594
        %v596 = vrot.slane %v595, 1
        %v597 = vmax.f32 %v595, %v596
        %v598 = vld [vmem:[#allocation6] sm:$0xff]
        %v599 = vld [vmem:[#allocation6 + $0x8] sm:$0xff]
        %v600 = vld [vmem:[#allocation6 + $0x10] sm:$0xff]
        %v601 = vld [vmem:[#allocation6 + $0x18] sm:$0xff]
        %v602 = vld [vmem:[#allocation6 + $0x20] sm:$0xff]
        %v603 = vld [vmem:[#allocation6 + $0x28] sm:$0xff]
        %v604 = vld [vmem:[#allocation6 + $0x30] sm:$0xff]
        %v605 = vld [vmem:[#allocation6 + $0x38] sm:$0xff]
        %v606 = vld [vmem:[#allocation6 + $0x40] sm:$0xff]
        %v607 = vld [vmem:[#allocation6 + $0x48] sm:$0xff]
        %v608 = vld [vmem:[#allocation6 + $0x50] sm:$0xff]
        %v609 = vld [vmem:[#allocation6 + $0x58] sm:$0xff]
        %v610 = vld [vmem:[#allocation6 + $0x60] sm:$0xff]
        %v611 = vld [vmem:[#allocation6 + $0x68] sm:$0xff]
        %v612 = vld [vmem:[#allocation6 + $0x70] sm:$0xff]
        %v613 = vld [vmem:[#allocation6 + $0x78] sm:$0xff]
        %v614 = vld [vmem:[#allocation6 + $0x80] sm:$0xff]
        %v615 = vld [vmem:[#allocation6 + $0x88] sm:$0xff]
        %v616 = vld [vmem:[#allocation6 + $0x90] sm:$0xff]
        %v617 = vld [vmem:[#allocation6 + $0x98] sm:$0xff]
        %v618 = vld [vmem:[#allocation6 + $0xa0] sm:$0xff]
        %v619 = vld [vmem:[#allocation6 + $0xa8] sm:$0xff]
        %v620 = vld [vmem:[#allocation6 + $0xb0] sm:$0xff]
        %v621 = vld [vmem:[#allocation6 + $0xb8] sm:$0xff]
        %v622 = vld [vmem:[#allocation6 + $0xc0] sm:$0xff]
        %v623 = vld [vmem:[#allocation6 + $0xc8] sm:$0xff]
        %v624 = vld [vmem:[#allocation6 + $0xd0] sm:$0xff]
        %v625 = vld [vmem:[#allocation6 + $0xd8] sm:$0xff]
        %v626 = vld [vmem:[#allocation6 + $0xe0] sm:$0xff]
        %v627 = vld [vmem:[#allocation6 + $0xe8] sm:$0xff]
        %v628 = vld [vmem:[#allocation6 + $0xf0] sm:$0xff]
        %v629 = vld [vmem:[#allocation6 + $0xf8] sm:$0xff]
        %v630 = vld [vmem:[#allocation6 + $0x100] sm:$0xff]
        %v631 = vld [vmem:[#allocation6 + $0x108] sm:$0xff]
        %v632 = vld [vmem:[#allocation6 + $0x110] sm:$0xff]
        %v633 = vld [vmem:[#allocation6 + $0x118] sm:$0xff]
        %v634 = vld [vmem:[#allocation6 + $0x120] sm:$0xff]
        %v635 = vld [vmem:[#allocation6 + $0x128] sm:$0xff]
        %v636 = vld [vmem:[#allocation6 + $0x130] sm:$0xff]
        %v637 = vld [vmem:[#allocation6 + $0x138] sm:$0xff]
        %v638 = vld [vmem:[#allocation6 + $0x140] sm:$0xff]
        %v639 = vld [vmem:[#allocation6 + $0x148] sm:$0xff]
        %v640 = vld [vmem:[#allocation6 + $0x150] sm:$0xff]
        %v641 = vld [vmem:[#allocation6 + $0x158] sm:$0xff]
        %v642 = vld [vmem:[#allocation6 + $0x160] sm:$0xff]
        %v643 = vld [vmem:[#allocation6 + $0x168] sm:$0xff]
        %v644 = vld [vmem:[#allocation6 + $0x170] sm:$0xff]
        %v645 = vld [vmem:[#allocation6 + $0x178] sm:$0xff]
        %v646 = vld [vmem:[#allocation6 + $0x180] sm:$0xff]
        %v647 = vld [vmem:[#allocation6 + $0x188] sm:$0xff]
        %v648 = vld [vmem:[#allocation6 + $0x190] sm:$0xff]
        %v649 = vld [vmem:[#allocation6 + $0x198] sm:$0xff]
        %v650 = vld [vmem:[#allocation6 + $0x1a0] sm:$0xff]
        %v651 = vld [vmem:[#allocation6 + $0x1a8] sm:$0xff]
        %v652 = vld [vmem:[#allocation6 + $0x1b0] sm:$0xff]
        %v653 = vld [vmem:[#allocation6 + $0x1b8] sm:$0xff]
        %v654 = vld [vmem:[#allocation6 + $0x1c0] sm:$0xff]
        %v655 = vld [vmem:[#allocation6 + $0x1c8] sm:$0xff]
        %v656 = vld [vmem:[#allocation6 + $0x1d0] sm:$0xff]
        %v657 = vld [vmem:[#allocation6 + $0x1d8] sm:$0xff]
        %v658 = vld [vmem:[#allocation6 + $0x1e0] sm:$0xff]
        %v659 = vld [vmem:[#allocation6 + $0x1e8] sm:$0xff]
        %v660 = vld [vmem:[#allocation6 + $0x1f0] sm:$0xff]
        %v661 = vld [vmem:[#allocation6 + $0x1f8] sm:$0xff]
        %v662 = vld [vmem:[#allocation6 + $0x200] sm:$0xff]
        %v663 = vld [vmem:[#allocation6 + $0x208] sm:$0xff]
        %v664 = vld [vmem:[#allocation6 + $0x210] sm:$0xff]
        %v665 = vld [vmem:[#allocation6 + $0x218] sm:$0xff]
        %v666 = vld [vmem:[#allocation6 + $0x220] sm:$0xff]
        %v667 = vld [vmem:[#allocation6 + $0x228] sm:$0xff]
        %v668 = vld [vmem:[#allocation6 + $0x230] sm:$0xff]
        %v669 = vld [vmem:[#allocation6 + $0x238] sm:$0xff]
        %v670 = vld [vmem:[#allocation6 + $0x240] sm:$0xff]
        %v671 = vld [vmem:[#allocation6 + $0x248] sm:$0xff]
        %v672 = vld [vmem:[#allocation6 + $0x250] sm:$0xff]
        %v673 = vld [vmem:[#allocation6 + $0x258] sm:$0xff]
        %v674 = vld [vmem:[#allocation6 + $0x260] sm:$0xff]
        %v675 = vld [vmem:[#allocation6 + $0x268] sm:$0xff]
        %v676 = vld [vmem:[#allocation6 + $0x270] sm:$0xff]
        %v677 = vld [vmem:[#allocation6 + $0x278] sm:$0xff]
        %v678 = vld [vmem:[#allocation6 + $0x280] sm:$0xff]
        %v679 = vld [vmem:[#allocation6 + $0x288] sm:$0xff]
        %v680 = vld [vmem:[#allocation6 + $0x290] sm:$0xff]
        %v681 = vld [vmem:[#allocation6 + $0x298] sm:$0xff]
        %v682 = vld [vmem:[#allocation6 + $0x2a0] sm:$0xff]
        %v683 = vld [vmem:[#allocation6 + $0x2a8] sm:$0xff]
        %v684 = vld [vmem:[#allocation6 + $0x2b0] sm:$0xff]
        %v685 = vld [vmem:[#allocation6 + $0x2b8] sm:$0xff]
        %v686 = vld [vmem:[#allocation6 + $0x2c0] sm:$0xff]
        %v687 = vld [vmem:[#allocation6 + $0x2c8] sm:$0xff]
        %v688 = vld [vmem:[#allocation6 + $0x2d0] sm:$0xff]
        %v689 = vld [vmem:[#allocation6 + $0x2d8] sm:$0xff]
        %v690 = vld [vmem:[#allocation6 + $0x2e0] sm:$0xff]
        %v691 = vld [vmem:[#allocation6 + $0x2e8] sm:$0xff]
        %v692 = vld [vmem:[#allocation6 + $0x2f0] sm:$0xff]
        %v693 = vld [vmem:[#allocation6 + $0x2f8] sm:$0xff]
        %v694 = vld [vmem:[#allocation6 + $0x300] sm:$0xff]
        %v695 = vld [vmem:[#allocation6 + $0x308] sm:$0xff]
        %v696 = vld [vmem:[#allocation6 + $0x310] sm:$0xff]
        %v697 = vld [vmem:[#allocation6 + $0x318] sm:$0xff]
        %v698 = vld [vmem:[#allocation6 + $0x320] sm:$0xff]
        %v699 = vld [vmem:[#allocation6 + $0x328] sm:$0xff]
        %v700 = vld [vmem:[#allocation6 + $0x330] sm:$0xff]
        %v701 = vld [vmem:[#allocation6 + $0x338] sm:$0xff]
        %v702 = vld [vmem:[#allocation6 + $0x340] sm:$0xff]
        %v703 = vld [vmem:[#allocation6 + $0x348] sm:$0xff]
        %v704 = vld [vmem:[#allocation6 + $0x350] sm:$0xff]
        %v705 = vld [vmem:[#allocation6 + $0x358] sm:$0xff]
        %v706 = vld [vmem:[#allocation6 + $0x360] sm:$0xff]
        %v707 = vld [vmem:[#allocation6 + $0x368] sm:$0xff]
        %v708 = vld [vmem:[#allocation6 + $0x370] sm:$0xff]
        %v709 = vld [vmem:[#allocation6 + $0x378] sm:$0xff]
        %v710 = vld [vmem:[#allocation6 + $0x380] sm:$0xff]
        %v711 = vld [vmem:[#allocation6 + $0x388] sm:$0xff]
        %v712 = vld [vmem:[#allocation6 + $0x390] sm:$0xff]
        %v713 = vld [vmem:[#allocation6 + $0x398] sm:$0xff]
        %v714 = vld [vmem:[#allocation6 + $0x3a0] sm:$0xff]
        %v715 = vld [vmem:[#allocation6 + $0x3a8] sm:$0xff]
        %v716 = vld [vmem:[#allocation6 + $0x3b0] sm:$0xff]
        %v717 = vld [vmem:[#allocation6 + $0x3b8] sm:$0xff]
        %v718 = vld [vmem:[#allocation6 + $0x3c0] sm:$0xff]
        %v719 = vld [vmem:[#allocation6 + $0x3c8] sm:$0xff]
        %v720 = vld [vmem:[#allocation6 + $0x3d0] sm:$0xff]
        %v721 = vld [vmem:[#allocation6 + $0x3d8] sm:$0xff]
        %v722 = vld [vmem:[#allocation6 + $0x3e0] sm:$0xff]
        %v723 = vld [vmem:[#allocation6 + $0x3e8] sm:$0xff]
        %v724 = vld [vmem:[#allocation6 + $0x3f0] sm:$0xff]
        %v725 = vld [vmem:[#allocation6 + $0x3f8] sm:$0xff]
        %s726 = sld [smem:[#allocation2]]
        %v727 = vstv %s726
        %728 = vmatprep.subr.mxu0 %v629
        %729 = vmatpush1.msra.mxu0 %v628
        %730 = vmatprep.subr.mxu0 %v627
        %731 = vmatpush1.msra.mxu0 %v626
        %732 = vmatprep.subr.mxu0 %v625
        %733 = vmatpush1.msra.mxu0 %v624
        %734 = vmatprep.subr.mxu0 %v623
        %735 = vmatpush1.msra.mxu0 %v622
        %736 = vmatprep.subr.mxu0 %v621
        %737 = vmatpush1.msra.mxu0 %v620
        %738 = vmatprep.subr.mxu0 %v619
        %739 = vmatpush1.msra.mxu0 %v618
        %740 = vmatprep.subr.mxu0 %v617
        %741 = vmatpush1.msra.mxu0 %v616
        %742 = vmatprep.subr.mxu0 %v615
        %743 = vmatpush1.msra.mxu0 %v614
        %744 = vmatprep.subr.mxu0 %v613
        %745 = vmatpush1.msra.mxu0 %v612
        %746 = vmatprep.subr.mxu0 %v611
        %747 = vmatpush1.msra.mxu0 %v610
        %748 = vmatprep.subr.mxu0 %v609
        %749 = vmatpush1.msra.mxu0 %v608
        %750 = vmatprep.subr.mxu0 %v607
        %751 = vmatpush1.msra.mxu0 %v606
        %752 = vmatprep.subr.mxu0 %v605
        %753 = vmatpush1.msra.mxu0 %v604
        %754 = vmatprep.subr.mxu0 %v603
        %755 = vmatpush1.msra.mxu0 %v602
        %756 = vmatprep.subr.mxu0 %v601
        %757 = vmatpush1.msra.mxu0 %v600
        %758 = vmatprep.subr.mxu0 %v599
        %759 = vmatpush1.msra.mxu0 %v598
        %760 = vmatprep.subr.mxu0 %v661
        %761 = vmatpush2.msra.mxu0 %v660
        %762 = vmatprep.subr.mxu0 %v659
        %763 = vmatpush2.msra.mxu0 %v658
        %764 = vmatprep.subr.mxu0 %v657
        %765 = vmatpush2.msra.mxu0 %v656
        %766 = vmatprep.subr.mxu0 %v655
        %767 = vmatpush2.msra.mxu0 %v654
        %768 = vmatprep.subr.mxu0 %v653
        %769 = vmatpush2.msra.mxu0 %v652
        %770 = vmatprep.subr.mxu0 %v651
        %771 = vmatpush2.msra.mxu0 %v650
        %772 = vmatprep.subr.mxu0 %v649
        %773 = vmatpush2.msra.mxu0 %v648
        %774 = vmatprep.subr.mxu0 %v647
        %775 = vmatpush2.msra.mxu0 %v646
        %776 = vmatprep.subr.mxu0 %v645
        %777 = vmatpush2.msra.mxu0 %v644
        %778 = vmatprep.subr.mxu0 %v643
        %779 = vmatpush2.msra.mxu0 %v642
        %780 = vmatprep.subr.mxu0 %v641
        %781 = vmatpush2.msra.mxu0 %v640
        %782 = vmatprep.subr.mxu0 %v639
        %783 = vmatpush2.msra.mxu0 %v638
        %784 = vmatprep.subr.mxu0 %v637
        %785 = vmatpush2.msra.mxu0 %v636
        %786 = vmatprep.subr.mxu0 %v635
        %787 = vmatpush2.msra.mxu0 %v634
        %788 = vmatprep.subr.mxu0 %v633
        %789 = vmatpush2.msra.mxu0 %v632
        %790 = vmatprep.subr.mxu0 %v631
        %791 = vmatpush2.msra.mxu0 %v630
        %792 = vmatprep.mubr.f32.mxu0 %v579
        %793 = vmatmul.mubr.f32.gmra.mxu0 %v578
        %v794 = vpop.f32.mrf.mxu0
        %v795 = vadd.f32 %v727, %v794
        %v796 = vpop.f32.mrf.mxu0
        %v797 = vadd.f32 %v727, %v796
        %798 = vdwg.mxu0
        %799 = vmatprep.subr.mxu0 %v693
        %800 = vmatpush1.msra.mxu0 %v692
        %801 = vmatprep.subr.mxu0 %v691
        %802 = vmatpush1.msra.mxu0 %v690
        %803 = vmatprep.subr.mxu0 %v689
        %804 = vmatpush1.msra.mxu0 %v688
        %805 = vmatprep.subr.mxu0 %v687
        %806 = vmatpush1.msra.mxu0 %v686
        %807 = vmatprep.subr.mxu0 %v685
        %808 = vmatpush1.msra.mxu0 %v684
        %809 = vmatprep.subr.mxu0 %v683
        %810 = vmatpush1.msra.mxu0 %v682
        %811 = vmatprep.subr.mxu0 %v681
        %812 = vmatpush1.msra.mxu0 %v680
        %813 = vmatprep.subr.mxu0 %v679
        %814 = vmatpush1.msra.mxu0 %v678
        %815 = vmatprep.subr.mxu0 %v677
        %816 = vmatpush1.msra.mxu0 %v676
        %817 = vmatprep.subr.mxu0 %v675
        %818 = vmatpush1.msra.mxu0 %v674
        %819 = vmatprep.subr.mxu0 %v673
        %820 = vmatpush1.msra.mxu0 %v672
        %821 = vmatprep.subr.mxu0 %v671
        %822 = vmatpush1.msra.mxu0 %v670
        %823 = vmatprep.subr.mxu0 %v669
        %824 = vmatpush1.msra.mxu0 %v668
        %825 = vmatprep.subr.mxu0 %v667
        %826 = vmatpush1.msra.mxu0 %v666
        %827 = vmatprep.subr.mxu0 %v665
        %828 = vmatpush1.msra.mxu0 %v664
        %829 = vmatprep.subr.mxu0 %v663
        %830 = vmatpush1.msra.mxu0 %v662
        %831 = vmatprep.subr.mxu0 %v725
        %832 = vmatpush2.msra.mxu0 %v724
        %833 = vmatprep.subr.mxu0 %v723
        %834 = vmatpush2.msra.mxu0 %v722
        %835 = vmatprep.subr.mxu0 %v721
        %836 = vmatpush2.msra.mxu0 %v720
        %837 = vmatprep.subr.mxu0 %v719
        %838 = vmatpush2.msra.mxu0 %v718
        %839 = vmatprep.subr.mxu0 %v717
        %840 = vmatpush2.msra.mxu0 %v716
        %841 = vmatprep.subr.mxu0 %v715
        %842 = vmatpush2.msra.mxu0 %v714
        %843 = vmatprep.subr.mxu0 %v713
        %844 = vmatpush2.msra.mxu0 %v712
        %845 = vmatprep.subr.mxu0 %v711
        %846 = vmatpush2.msra.mxu0 %v710
        %847 = vmatprep.subr.mxu0 %v709
        %848 = vmatpush2.msra.mxu0 %v708
        %849 = vmatprep.subr.mxu0 %v707
        %850 = vmatpush2.msra.mxu0 %v706
        %851 = vmatprep.subr.mxu0 %v705
        %852 = vmatpush2.msra.mxu0 %v704
        %853 = vmatprep.subr.mxu0 %v703
        %854 = vmatpush2.msra.mxu0 %v702
        %855 = vmatprep.subr.mxu0 %v701
        %856 = vmatpush2.msra.mxu0 %v700
        %857 = vmatprep.subr.mxu0 %v699
        %858 = vmatpush2.msra.mxu0 %v698
        %859 = vmatprep.subr.mxu0 %v697
        %860 = vmatpush2.msra.mxu0 %v696
        %861 = vmatprep.subr.mxu0 %v695
        %862 = vmatpush2.msra.mxu0 %v694
        %863 = vmatprep.mubr.f32.mxu0 %v597
        %864 = vmatmul.mubr.f32.gmra.mxu0 %v588
        %v865 = vpop.f32.mrf.mxu0
        %v866 = vadd.f32 %v795, %v865
        %v867 = vpop.f32.mrf.mxu0
        %v868 = vadd.f32 %v797, %v867
        %869 = vdwg.mxu0
        %v870 = vxor.u32 %v866, 2147483648
        %v871 = vxor.u32 %v868, 2147483648
        %v872 = vmul.f32 %v870, 1.442695
        %v873 = vpow.pop %v872
        %v874 = vmul.f32 %v871, 1.442695
        %v875 = vpow.pop %v874
        %v876 = vadd.f32 %v873, 1.0
        %v877 = vadd.f32 %v875, 1.0
        %v878 = vrcp.pop %v876
        %v879 = vmul.f32 1.0, %v878
        %v880 = vrcp.pop %v877
        %v881 = vmul.f32 1.0, %v880
        %v882 = vlaneseq
        %v883 = vshrl.u32 %v882, 7
        %v884 = vsub.s32 0, %v883
        %v885 = vrot.slane %v879, %v884
        %v886 = vlaneseq
        %v887 = vshrl.u32 %v886, 7
        %v888 = vsub.s32 0, %v887
        %v889 = vrot.slane %v881, %v888
        %v890 = vmul.f32 %v551, %v885
        %v891 = vmul.f32 %v552, %v889
        %v892 = vmul.f32 %v553, %v885
        %v893 = vmul.f32 %v554, %v889
        %v894 = vmul.f32 %v555, %v885
        %v895 = vmul.f32 %v556, %v889
        %v896 = vmul.f32 %v557, %v885
        %v897 = vmul.f32 %v558, %v889
        %898 = vst [vmem:[%s258] sm:$0xff] %v890
        %899 = vst [vmem:[%s258 + $0x8] sm:$0xff] %v891
        %900 = vst [vmem:[%s258 + $0x10] sm:$0xff] %v892
        %901 = vst [vmem:[%s258 + $0x18] sm:$0xff] %v893
        %902 = vst [vmem:[%s258 + $0x20] sm:$0xff] %v894
        %903 = vst [vmem:[%s258 + $0x28] sm:$0xff] %v895
        %904 = vst [vmem:[%s258 + $0x30] sm:$0xff] %v896
        %905 = vst [vmem:[%s258 + $0x38] sm:$0xff] %v897
        %s906 = sand.u32 %s142, 1
        %s907 = scalar_lea.sflag [#allocation5], %s906
        %s908 = sand.u32 %s142, 1
        %s909 = smul.addr %s908, 64
        %s910 = scalar_lea.vmem [#allocation8], %s909
        // Predicated region
        $region49: #{tpu_custom_call.1} parent=39 // pred_check
          %p911 = pneg %p152
        $region50: #{tpu_custom_call.1} parent=39 // pred_check_branch
          %913 = sbr.rel (%p911) target = $region52
        $region51: #{tpu_custom_call.1} parent=39 // pred_region
          %s915 = ssub.s32 1024, 1024
          %916 = vsyncadd %s907, %s915
          %s917 = smul.addr %s24, 8
          %s918 = smul.addr %s917, 128
          %s919 = scalar_lea.hbm %s5, %s918
          %s920 = sshll.u32 %s910, 4
          %s921 = int_to_ptr.vmem [resolvable:$true] %s920
          %926 = dma.vmem_to_hbm [thread:$0]  %s921, 1024, %s919, %s907, 256, 256, 16
        $region52: #{tpu_custom_call.1} parent=39 // pred_fallthru
          _
      $region40: #{tpu_custom_call.1} parent=5 // pred_fallthru
        _
      %p927 = scmp.le.s32.totalorder 2, %s19
      // Predicated region
      $region53: #{tpu_custom_call.1} parent=5 // pred_check
        %p928 = pneg %p927
      $region54: #{tpu_custom_call.1} parent=5 // pred_check_branch
        %930 = sbr.rel (%p928) target = $region56
      $region55: #{tpu_custom_call.1} parent=5 // pred_region
        %s931 = ssub.s32 %s19, 2
        // Predicated region
        $region57: #{tpu_custom_call.1} parent=55 // pred_check
          %p932 = pneg %p158
        $region58: #{tpu_custom_call.1} parent=55 // pred_check_branch
          %934 = sbr.rel (%p932) target = $region60
        $region59: #{tpu_custom_call.1} parent=55 // pred_region
          %s935 = sand.u32 %s143, 1
          %s936 = scalar_lea.sflag [#allocation5], %s935
          %s937 = sand.u32 %s143, 1
          %s938 = smul.addr %s937, 64
          %s939 = scalar_lea.vmem [#allocation8], %s938
          %940 = dma.done %s936, 1024
        $region60: #{tpu_custom_call.1} parent=55 // pred_fallthru
          _
      $region56: #{tpu_custom_call.1} parent=5 // pred_fallthru
        _
    $region6: #{tpu_custom_call.1} parent=1 // loop_footer
      %s23 = sadd.s32 1, %s19
    $region7: #{tpu_custom_call.1} parent=1 // loop_footer_branch
      %18 = sbr.rel target = $region3
    $region8: #{tpu_custom_call.1} parent=1 // loop_exit
      _
    %941 = vsyncpa [#allocation4], 1
    %s942 = scalar_lea.sflag [#allocation4], 1
    %943 = vsyncpa %s942, 1
    %944 = vsyncpa [#allocation7], 1
    %945 = vsyncpa [#allocation5], 1
    %s946 = scalar_lea.sflag [#allocation5], 1
    %947 = vsyncpa %s946, 1

</llo_original>
